<compile_context>
chip_gen: v5e
topology: v5e:2x2
jax: 0.10.0
libtpu: 0.0.40
codegen_flags: <defaults>
</compile_context>

<pallas_src>
import jax
import jax.numpy as jnp
from jax.experimental import pallas as pl
from jax.experimental.pallas import tpu as pltpu

EPS = 1e-07
LANE = 128
SUBLANE_BF16 = 16


def _round_up(x, m):
    return ((x + m - 1) // m) * m


def _normal_decoder_kernel(b_ref, u_ref, vt_ref, tab_ref, loc_ref, std_ref):
    row_tile, mp = loc_ref.shape
    nb_p = tab_ref.shape[0]

    # z = u @ v.T   (bf16 operands -> MXU bf16 path, f32 accumulation)
    z = jnp.dot(u_ref[...], vt_ref[...], preferred_element_type=jnp.float32)

    # Per-row gather of the pre-softplus'ed batch parameter table via an exact
    # one-hot matmul on the MXU (multiplies by 1.0 / adds 0.0 -> bit-exact f32).
    b_col = b_ref[...]                                               # (row_tile, 1) i32
    k_ids = jax.lax.broadcasted_iota(jnp.int32, (row_tile, nb_p), 1)
    onehot = (b_col == k_ids).astype(jnp.float32)                    # (row_tile, nb_p)
    params = jnp.dot(onehot, tab_ref[...],
                     preferred_element_type=jnp.float32)             # (row_tile, 3*Mp)

    scale = params[:, 0:mp]          # softplus(scale_lin[b])
    bias = params[:, mp:2 * mp]      # bias[b]
    std = params[:, 2 * mp:3 * mp]   # softplus(std_lin[b]) + EPS

    loc_ref[...] = scale * z + bias
    std_ref[...] = std


def normal_data_decoder_forward(u, v, b, scale_lin, bias, std_lin, *, tm=256):
    """Returns (loc, std) of the Normal distribution produced by NormalDataDecoder."""
    N, L = u.shape
    M = v.shape[0]                      # out_features
    nb = scale_lin.shape[0]             # n_batches

    Mp = _round_up(M, LANE)             # lane-dense outputs / full MXU columns
    Lp = _round_up(L, LANE)             # lane-dense u loads / full MXU K pass
    nb_p = _round_up(nb, 8)             # sublane-aligned parameter table

    row_tile = _round_up(min(tm, _round_up(N, SUBLANE_BF16)), SUBLANE_BF16)
    grid = (pl.cdiv(N, row_tile),)

    # --- small operands only: pad / cast (zero K-padding is exact) -----------
    u_p = jnp.zeros((N, Lp), jnp.bfloat16).at[:, :L].set(u.astype(jnp.bfloat16))
    vt_p = jnp.zeros((Lp, Mp), jnp.bfloat16).at[:L, :M].set(v.T.astype(jnp.bfloat16))
    b_col = b.reshape(N, 1).astype(jnp.int32)

    # softplus hoisted out of the hot loop: once per batch row on the tiny table,
    # packed as [ softplus(scale_lin) | bias | softplus(std_lin)+EPS ].
    tab = jnp.zeros((nb_p, 3 * Mp), jnp.float32)
    tab = tab.at[:nb, 0:M].set(jax.nn.softplus(scale_lin.astype(jnp.float32)))
    tab = tab.at[:nb, Mp:Mp + M].set(bias.astype(jnp.float32))
    tab = tab.at[:nb, 2 * Mp:2 * Mp + M].set(
        jax.nn.softplus(std_lin.astype(jnp.float32)) + EPS)

    row_out_spec = pl.BlockSpec((row_tile, Mp), lambda i: (i, 0))

    # explicit VMEM budget (double-buffered blocks + resident weight/table),
    # clamped so it stays valid on v7x's 64 MiB physical VMEM.
    vmem_need = 2 * (row_tile * Lp * 2 + row_tile * 4
                     + Lp * Mp * 2 + nb_p * 3 * Mp * 4
                     + 2 * row_tile * Mp * 4)
    vmem_limit = int(min(max(2 * vmem_need, 16 * 1024 * 1024), 64 * 1024 * 1024))

    cost = pl.CostEstimate(
        flops=2 * N * Lp * Mp + 2 * N * nb_p * 3 * Mp + 2 * N * Mp,
        transcendentals=0,
        bytes_accessed=(N * Lp * 2 + N * 4 + Lp * Mp * 2
                        + nb_p * 3 * Mp * 4 + 2 * N * Mp * 4),
    )

    loc, std = pl.pallas_call(
        _normal_decoder_kernel,
        grid=grid,
        in_specs=[
            pl.BlockSpec((row_tile, 1), lambda i: (i, 0)),    # b row tile (i32)
            pl.BlockSpec((row_tile, Lp), lambda i: (i, 0)),   # u row tile (bf16)
            pl.BlockSpec((Lp, Mp), lambda i: (0, 0)),         # v.T, resident (bf16)
            pl.BlockSpec((nb_p, 3 * Mp), lambda i: (0, 0)),   # param table, resident (f32)
        ],
        out_specs=[row_out_spec, row_out_spec],
        out_shape=[
            jax.ShapeDtypeStruct((N, Mp), jnp.float32),
            jax.ShapeDtypeStruct((N, Mp), jnp.float32),
        ],
        compiler_params=pltpu.CompilerParams(
            dimension_semantics=("parallel",),
            vmem_limit_bytes=vmem_limit),
        cost_estimate=cost,
    )(b_col, u_p, vt_p, tab)

    # slice away lane padding only when out_features is not already lane-aligned
    if Mp != M:
        loc = loc[:, :M]
        std = std[:, :M]
    return loc, std


def _reference_forward(u, v, b, scale_lin, bias, std_lin):
    """Pure-JAX reference mirroring the PyTorch module semantics (f32)."""
    scale = jax.nn.softplus(scale_lin[b])
    loc = scale * (u @ v.T) + bias[b]
    std = jax.nn.softplus(std_lin[b]) + EPS
    return loc, std


if __name__ == "__main__":
    # small shapes consistent with the module: u:(N, latent), v:(out_features, latent)
    N, latent, out_features, n_batches = 16, 32, 48, 3
    key = jax.random.PRNGKey(0)
    k1, k2, k3, k4, k5, k6 = jax.random.split(key, 6)

    # NOTE: nn.Parameter in __init__ is zeros; small random values are used so the
    # kernel exercises a non-trivial path (deterministic, in-script init).
    u = jax.random.normal(k1, (N, latent), jnp.float32) * 0.1
    v = jax.random.normal(k2, (out_features, latent), jnp.float32) * 0.1
    b = jax.random.randint(k3, (N,), 0, n_batches).astype(jnp.int32)
    scale_lin = jax.random.normal(k4, (n_batches, out_features), jnp.float32) * 0.1
    bias = jax.random.normal(k5, (n_batches, out_features), jnp.float32) * 0.1
    std_lin = jax.random.normal(k6, (n_batches, out_features), jnp.float32) * 0.1

    loc, std = normal_data_decoder_forward(u, v, b, scale_lin, bias, std_lin)
    jax.block_until_ready((loc, std))

    loc_ref, std_ref = _reference_forward(u, v, b, scale_lin, bias, std_lin)
    # loc goes through the bf16 MXU path (f32 accumulate) -> slightly looser tol.
    assert jnp.allclose(loc, loc_ref, atol=5e-3, rtol=5e-2)
    # std / scale / bias are gathered bit-exactly in f32 -> tight tolerance.
    assert jnp.allclose(std, std_ref, atol=1e-5, rtol=1e-5)
    assert jnp.all(std > 0)

    # TODO(synk): torch.distributions.Normal object construction has no Pallas
    # equivalent; the kernel returns its (loc, std) parameters.
    print("KERNEL_OK")
</pallas_src>

<mosaic_0001>
module attributes {stable_mosaic.version = 11 : i64} {
  func.func @_normal_decoder_kernel(%arg0: i32, %arg1: memref<16x1xi32, #tpu.memory_space<vmem>>, %arg2: memref<16x128xbf16, #tpu.memory_space<vmem>>, %arg3: memref<128x128xbf16, #tpu.memory_space<vmem>>, %arg4: memref<8x384xf32, #tpu.memory_space<vmem>>, %arg5: memref<16x128xf32, #tpu.memory_space<vmem>>, %arg6: memref<16x128xf32, #tpu.memory_space<vmem>>) attributes {dimension_semantics = [#tpu.dimension_semantics<parallel>], iteration_bounds = array<i64: 1>, scalar_prefetch = 0 : i64, scratch_operands = 0 : i64, tpu.core_type = #tpu.core_type<tc>, window_params = [{transform_indices = @transform_0, window_bounds = array<i64: 16, 1>}, {transform_indices = @transform_1, window_bounds = array<i64: 16, 128>}, {pipeline_mode = #tpu.pipeline_mode<synchronous>, transform_indices = @transform_2, window_bounds = array<i64: 128, 128>}, {pipeline_mode = #tpu.pipeline_mode<synchronous>, transform_indices = @transform_3, window_bounds = array<i64: 8, 384>}, {transform_indices = @transform_4, window_bounds = array<i64: 16, 128>}, {transform_indices = @transform_5, window_bounds = array<i64: 16, 128>}]} {
    %c0 = arith.constant 0 : index
    %c0_0 = arith.constant 0 : index
    %0 = vector.load %arg2[%c0, %c0_0] : memref<16x128xbf16, #tpu.memory_space<vmem>>, vector<16x128xbf16>
    %c0_1 = arith.constant 0 : index
    %c0_2 = arith.constant 0 : index
    %1 = vector.load %arg3[%c0_1, %c0_2] : memref<128x128xbf16, #tpu.memory_space<vmem>>, vector<128x128xbf16>
    %cst = arith.constant dense<0.000000e+00> : vector<16x128xf32>
    %2 = tpu.matmul %0, %1, %cst {dimension_numbers = #tpu.dot_dimension_numbers<[1], [0], [0], [1], [0, 0, 1, 1], [], []>} : vector<16x128xbf16>, vector<128x128xbf16>, vector<16x128xf32> -> vector<16x128xf32>
    %c0_3 = arith.constant 0 : index
    %c0_4 = arith.constant 0 : index
    %3 = vector.load %arg1[%c0_3, %c0_4] : memref<16x1xi32, #tpu.memory_space<vmem>>, vector<16x1xi32>
    %4 = tpu.iota {dimensions = array<i32: 1>} : vector<16x8xi32>
    %5 = vector.broadcast %3 : vector<16x1xi32> to vector<16x8xi32>
    %6 = arith.cmpi eq, %5, %4 : vector<16x8xi32>
    %7 = arith.extui %6 : vector<16x8xi1> to vector<16x8xi32>
    %8 = arith.sitofp %7 : vector<16x8xi32> to vector<16x8xf32>
    %c0_5 = arith.constant 0 : index
    %c0_6 = arith.constant 0 : index
    %9 = vector.load %arg4[%c0_5, %c0_6] : memref<8x384xf32, #tpu.memory_space<vmem>>, vector<8x384xf32>
    %cst_7 = arith.constant dense<0.000000e+00> : vector<16x384xf32>
    %10 = tpu.matmul %8, %9, %cst_7 {dimension_numbers = #tpu.dot_dimension_numbers<[1], [0], [0], [1], [0, 0, 1, 1], [], []>} : vector<16x8xf32>, vector<8x384xf32>, vector<16x384xf32> -> vector<16x384xf32>
    %11 = vector.extract_strided_slice %10 {offsets = [0, 0], sizes = [16, 128], strides = [1, 1]} : vector<16x384xf32> to vector<16x128xf32>
    %12 = vector.extract_strided_slice %10 {offsets = [0, 128], sizes = [16, 128], strides = [1, 1]} : vector<16x384xf32> to vector<16x128xf32>
    %13 = vector.extract_strided_slice %10 {offsets = [0, 256], sizes = [16, 128], strides = [1, 1]} : vector<16x384xf32> to vector<16x128xf32>
    %14 = arith.mulf %11, %2 : vector<16x128xf32>
    %15 = arith.addf %14, %12 : vector<16x128xf32>
    %c0_8 = arith.constant 0 : index
    %c0_9 = arith.constant 0 : index
    %16 = vector.load %arg5[%c0_8, %c0_9] : memref<16x128xf32, #tpu.memory_space<vmem>>, vector<16x128xf32>
    tpu.vector_store %arg5[%c0_8, %c0_9], %15 {strides = array<i32>} : memref<16x128xf32, #tpu.memory_space<vmem>>, vector<16x128xf32>,
    %c0_10 = arith.constant 0 : index
    %c0_11 = arith.constant 0 : index
    %17 = vector.load %arg6[%c0_10, %c0_11] : memref<16x128xf32, #tpu.memory_space<vmem>>, vector<16x128xf32>
    tpu.vector_store %arg6[%c0_10, %c0_11], %13 {strides = array<i32>} : memref<16x128xf32, #tpu.memory_space<vmem>>, vector<16x128xf32>,
    return
  }
  func.func @transform_0(%arg0: i32) -> (i32, i32) {
    %c0_i32 = arith.constant 0 : i32
    %c0_i32_0 = arith.constant 0 : i32
    return %arg0, %c0_i32 : i32, i32
  }
  func.func @transform_1(%arg0: i32) -> (i32, i32) {
    %c0_i32 = arith.constant 0 : i32
    %c0_i32_0 = arith.constant 0 : i32
    return %arg0, %c0_i32 : i32, i32
  }
  func.func @transform_2(%arg0: i32) -> (i32, i32) {
    %c0_i32 = arith.constant 0 : i32
    %c0_i32_0 = arith.constant 0 : i32
    %c0_i32_1 = arith.constant 0 : i32
    return %c0_i32, %c0_i32_0 : i32, i32
  }
  func.func @transform_3(%arg0: i32) -> (i32, i32) {
    %c0_i32 = arith.constant 0 : i32
    %c0_i32_0 = arith.constant 0 : i32
    %c0_i32_1 = arith.constant 0 : i32
    return %c0_i32, %c0_i32_0 : i32, i32
  }
  func.func @transform_4(%arg0: i32) -> (i32, i32) {
    %c0_i32 = arith.constant 0 : i32
    %c0_i32_0 = arith.constant 0 : i32
    return %arg0, %c0_i32 : i32, i32
  }
  func.func @transform_5(%arg0: i32) -> (i32, i32) {
    %c0_i32 = arith.constant 0 : i32
    %c0_i32_0 = arith.constant 0 : i32
    return %arg0, %c0_i32 : i32, i32
  }
}

</mosaic_0001>

<llo_original>
// kernel: tpu_custom_call.1
$region0: #{tpu_custom_call.1}
  #allocation0 [shape = 'u32[]', space=smem, size = 0x4, offset = 0x4, fixed_abs, tag = 'smem constant byte address 0x4 - core index']
  #allocation1 [shape = 'u32[72,128]{1,0:T(1,128)}', space=vmem, size = 0x9000, scoped, tag = 'internal scratch']
  %s0 = inlined_call_operand.vmem [shape: s32[16,1], index: 0, kind: input, shape index: {}]
  %s1 = inlined_call_operand.vmem [shape: bf16[16,128], index: 1, kind: input, shape index: {}]
  %s2 = inlined_call_operand.hbm [shape: bf16[128,128], index: 2, kind: input, shape index: {}]
  %s3 = inlined_call_operand.hbm [shape: f32[8,384], index: 3, kind: input, shape index: {}]
  %s4 = inlined_call_operand.hbm [shape: f32[16,128], index: 4, kind: output, shape index: {0}]
  %s5 = inlined_call_operand.hbm [shape: f32[16,128], index: 5, kind: output, shape index: {1}]
  %6 = xla_tuple %s4, %s5
  %s7 = sld [smem:[#allocation0]]
  $region42: #{tpu_custom_call.1} parent=0
    _
  %s9 = ssub.s32 1, %s7
  %s10 = scalar_select 0, %s9, %s7
  $region1: #{tpu_custom_call.1} parent=0
    #allocation2 [shape = 'u8[32768]{0}', space=vmem, size = 0x8000, scoped, tag = 'input window, operand 2, single buffered']
    #allocation3 [shape = 's32[1]{0}', space=sflag, size = 0x4, scoped, tag = 'scoped memory for tpu_custom_call.1']
    #allocation4 [shape = 's32[1]{0}', space=sflag, size = 0x4, scoped, tag = 'scoped memory for tpu_custom_call.1']
    #allocation5 [shape = 'u8[12288]{0}', space=vmem, size = 0x3000, scoped, tag = 'input window, operand 3, single buffered']
    #allocation6 [shape = 's32[1]{0}', space=sflag, size = 0x4, scoped, tag = 'scoped memory for tpu_custom_call.1']
    #allocation7 [shape = 'u8[8192]{0}', space=vmem, size = 0x2000, scoped, tag = 'output window, operand 0, single buffered']
    #allocation8 [shape = 'u8[8192]{0}', space=vmem, size = 0x2000, scoped, tag = 'output window, operand 1, single buffered']
    #allocation9 [shape = 's32[1]{0}', space=sflag, size = 0x4, scoped, tag = 'scoped memory for tpu_custom_call.1']
    %11 = vsyncpa [#allocation3], 0
    %12 = vsyncpa [#allocation6], 0
    %13 = vsyncpa [#allocation4], 0
    %14 = vsyncpa [#allocation9], 0
    // Predicated region
    $region2: #{tpu_custom_call.1} parent=1 // pred_check
      _
    $region3: #{tpu_custom_call.1} parent=1 // pred_check_branch
      %16 = sbr.rel (0) target = $region5
    $region4: #{tpu_custom_call.1} parent=1 // pred_region
      _
    $region5: #{tpu_custom_call.1} parent=1 // pred_fallthru
      _
    // Predicated region
    $region6: #{tpu_custom_call.1} parent=1 // pred_check
      _
    $region7: #{tpu_custom_call.1} parent=1 // pred_check_branch
      %18 = sbr.rel (0) target = $region9
    $region8: #{tpu_custom_call.1} parent=1 // pred_region
      _
    $region9: #{tpu_custom_call.1} parent=1 // pred_fallthru
      _
    // Predicated region
    $region10: #{tpu_custom_call.1} parent=1 // pred_check
      _
    $region11: #{tpu_custom_call.1} parent=1 // pred_check_branch
      %20 = sbr.rel (0) target = $region13
    $region12: #{tpu_custom_call.1} parent=1 // pred_region
      %22 = vsyncadd [#allocation3], 0
      %s23 = sshll.u32 %s2, 4
      %s24 = int_to_ptr.hbm [resolvable:$true] %s23
      %s25 = sshll.u32 [#allocation2], 4
      %s26 = int_to_ptr.vmem [resolvable:$true] %s25
      %31 = dma.hbm_to_vmem [thread:$0]  %s24, 1024, %s26, [#allocation3], 64, 64, 4
    $region13: #{tpu_custom_call.1} parent=1 // pred_fallthru
      _
    // Predicated region
    $region14: #{tpu_custom_call.1} parent=1 // pred_check
      _
    $region15: #{tpu_custom_call.1} parent=1 // pred_check_branch
      %33 = sbr.rel (0) target = $region17
    $region16: #{tpu_custom_call.1} parent=1 // pred_region
      %35 = vsyncadd [#allocation6], 0
      %s37 = sshll.u32 %s3, 4
      %s38 = int_to_ptr.hbm [resolvable:$true] %s37
      %s39 = sshll.u32 [#allocation5], 4
      %s40 = int_to_ptr.vmem [resolvable:$true] %s39
      %42 = dma.hbm_to_vmem [thread:$0]  %s38, 384, %s40, [#allocation6]
    $region17: #{tpu_custom_call.1} parent=1 // pred_fallthru
      _
    // Predicated region
    $region18: #{tpu_custom_call.1} parent=1 // pred_check
      _
    $region19: #{tpu_custom_call.1} parent=1 // pred_check_branch
      %44 = sbr.rel (0) target = $region21
    $region20: #{tpu_custom_call.1} parent=1 // pred_region
      %46 = dma.done [#allocation3], 1024
    $region21: #{tpu_custom_call.1} parent=1 // pred_fallthru
      _
    // Predicated region
    $region22: #{tpu_custom_call.1} parent=1 // pred_check
      _
    $region23: #{tpu_custom_call.1} parent=1 // pred_check_branch
      %48 = sbr.rel (0) target = $region25
    $region24: #{tpu_custom_call.1} parent=1 // pred_region
      %50 = dma.done [#allocation6], 384
    $region25: #{tpu_custom_call.1} parent=1 // pred_fallthru
      _
    %v51 = vld [vmem:[%s1] sm:$0xf]
    %v52 = vld [vmem:[%s1 + $0x4] sm:$0xf]
    %v53 = vld [vmem:[#allocation2] sm:$0xf]
    %v54 = vld [vmem:[#allocation2 + $0x4] sm:$0xf]
    %v55 = vld [vmem:[#allocation2 + $0x8] sm:$0xf]
    %v56 = vld [vmem:[#allocation2 + $0xc] sm:$0xf]
    %v57 = vld [vmem:[#allocation2 + $0x10] sm:$0xf]
    %v58 = vld [vmem:[#allocation2 + $0x14] sm:$0xf]
    %v59 = vld [vmem:[#allocation2 + $0x18] sm:$0xf]
    %v60 = vld [vmem:[#allocation2 + $0x1c] sm:$0xf]
    %v61 = vld [vmem:[#allocation2 + $0x20] sm:$0xf]
    %v62 = vld [vmem:[#allocation2 + $0x24] sm:$0xf]
    %v63 = vld [vmem:[#allocation2 + $0x28] sm:$0xf]
    %v64 = vld [vmem:[#allocation2 + $0x2c] sm:$0xf]
    %v65 = vld [vmem:[#allocation2 + $0x30] sm:$0xf]
    %v66 = vld [vmem:[#allocation2 + $0x34] sm:$0xf]
    %v67 = vld [vmem:[#allocation2 + $0x38] sm:$0xf]
    %v68 = vld [vmem:[#allocation2 + $0x3c] sm:$0xf]
    %v71 = vunpack.c.l.b16 %v51
    %v72 = vunpack.c.l.b16 %v52
    %v73 = vpack.c.b16 %v72, %v71
    %v91 = vunpack.c.l.b16 %v53
    %v92 = vunpack.c.l.b16 %v54
    %v93 = vunpack.c.l.b16 %v55
    %v94 = vunpack.c.l.b16 %v56
    %v95 = vunpack.c.l.b16 %v57
    %v96 = vunpack.c.l.b16 %v58
    %v97 = vunpack.c.l.b16 %v59
    %v98 = vunpack.c.l.b16 %v60
    %v99 = vunpack.c.l.b16 %v61
    %v100 = vunpack.c.l.b16 %v62
    %v101 = vunpack.c.l.b16 %v63
    %v102 = vunpack.c.l.b16 %v64
    %v103 = vunpack.c.l.b16 %v65
    %v104 = vunpack.c.l.b16 %v66
    %v105 = vunpack.c.l.b16 %v67
    %v106 = vunpack.c.l.b16 %v68
    %v107 = vpack.c.b16 %v92, %v91
    %v108 = vpack.c.b16 %v94, %v93
    %v109 = vpack.c.b16 %v96, %v95
    %v110 = vpack.c.b16 %v98, %v97
    %v111 = vpack.c.b16 %v100, %v99
    %v112 = vpack.c.b16 %v102, %v101
    %v113 = vpack.c.b16 %v104, %v103
    %v114 = vpack.c.b16 %v106, %v105
    %123 = vmatpush.bf16.msra.mxu0 %v114
    %124 = vmatpush.bf16.msra.mxu0 %v113
    %125 = vmatpush.bf16.msra.mxu0 %v112
    %126 = vmatpush.bf16.msra.mxu0 %v111
    %127 = vmatpush.bf16.msra.mxu0 %v110
    %128 = vmatpush.bf16.msra.mxu0 %v109
    %129 = vmatpush.bf16.msra.mxu0 %v108
    %130 = vmatpush.bf16.msra.mxu0 %v107
    %131 = vmatmul.bf16.gmra.mxu0 %v73
    %v132 = vpop.f32.mrf.mxu0
    %v133 = vadd.f32 0.0, %v132
    %v134 = vpop.f32.mrf.mxu0
    %v135 = vadd.f32 0.0, %v134
    %136 = vdwg.mxu0
    %v137 = vld [vmem:[%s0] sm:$0xff]
    %v138 = vld [vmem:[%s0 + $0x8] sm:$0xff]
    %v139 = vlaneseq
    %v140 = vand.u32 %v139, 127
    %141 = vset.pattern.permute.xlu0 0
    %142 = vperm.xlu0 %141, %v137
    %v143 = vpop.permute.xlu0 %142
    %144 = vset.pattern.permute.xlu0 0
    %145 = vperm.xlu0 %144, %v138
    %v146 = vpop.permute.xlu0 %145
    %vm147 = vcmp.eq.s32.totalorder %v143, %v140
    %vm148 = vcmp.eq.s32.totalorder %v146, %v140
    %v149 = vsel %vm147, 1, 0
    %v150 = vsel %vm148, 1, 0
    %v151 = vcvt.s32.f32 %v149
    %v152 = vcvt.s32.f32 %v150
    %v153 = vld [vmem:[#allocation5] sm:$0xff]
    %v154 = vld [vmem:[#allocation5 + $0x8] sm:$0xff]
    %v155 = vld [vmem:[#allocation5 + $0x10] sm:$0xff]
    %vm156 = vcmask 64512
    %v158 = vsel %vm156, %v151, 0
    %v161 = vsel %vm156, %v152, 0
    %163 = vmatpush.msra.mxu0 0.0
    %164 = vmatpush.msra.mxu0 0.0
    %165 = vmatpush.msra.mxu0 0.0
    %166 = vmatpush.msra.mxu0 0.0
    %167 = vmatpush.msra.mxu0 0.0
    %168 = vmatpush.msra.mxu0 0.0
    %169 = vmatpush.msra.mxu0 0.0
    %170 = vmatpush.msra.mxu0 0.0
    %171 = vmatpush.msra.mxu0 0.0
    %172 = vmatpush.msra.mxu0 0.0
    %173 = vmatpush.msra.mxu0 0.0
    %174 = vmatpush.msra.mxu0 0.0
    %175 = vmatpush.msra.mxu0 0.0
    %176 = vmatpush.msra.mxu0 0.0
    %177 = vmatpush.msra.mxu0 0.0
    %178 = vmatpush.msra.mxu0 %v153
    %179 = vmatmul.f32.gmra.mxu0 %v158
    %v180 = vpop.f32.mrf.mxu0
    %v181 = vadd.f32 0.0, %v180
    %182 = vmatmul.f32.gmra.mxu0 %v161
    %v183 = vpop.f32.mrf.mxu0
    %v184 = vadd.f32 0.0, %v183
    %185 = vdwg.mxu0
    %186 = vmatpush.msra.mxu0 0.0
    %187 = vmatpush.msra.mxu0 0.0
    %188 = vmatpush.msra.mxu0 0.0
    %189 = vmatpush.msra.mxu0 0.0
    %190 = vmatpush.msra.mxu0 0.0
    %191 = vmatpush.msra.mxu0 0.0
    %192 = vmatpush.msra.mxu0 0.0
    %193 = vmatpush.msra.mxu0 0.0
    %194 = vmatpush.msra.mxu0 0.0
    %195 = vmatpush.msra.mxu0 0.0
    %196 = vmatpush.msra.mxu0 0.0
    %197 = vmatpush.msra.mxu0 0.0
    %198 = vmatpush.msra.mxu0 0.0
    %199 = vmatpush.msra.mxu0 0.0
    %200 = vmatpush.msra.mxu0 0.0
    %201 = vmatpush.msra.mxu0 %v154
    %202 = vmatmul.f32.gmra.mxu0 %v158
    %v203 = vpop.f32.mrf.mxu0
    %v204 = vadd.f32 0.0, %v203
    %205 = vmatmul.f32.gmra.mxu0 %v161
    %v206 = vpop.f32.mrf.mxu0
    %v207 = vadd.f32 0.0, %v206
    %208 = vdwg.mxu0
    %209 = vmatpush.msra.mxu0 0.0
    %210 = vmatpush.msra.mxu0 0.0
    %211 = vmatpush.msra.mxu0 0.0
    %212 = vmatpush.msra.mxu0 0.0
    %213 = vmatpush.msra.mxu0 0.0
    %214 = vmatpush.msra.mxu0 0.0
    %215 = vmatpush.msra.mxu0 0.0
    %216 = vmatpush.msra.mxu0 0.0
    %217 = vmatpush.msra.mxu0 0.0
    %218 = vmatpush.msra.mxu0 0.0
    %219 = vmatpush.msra.mxu0 0.0
    %220 = vmatpush.msra.mxu0 0.0
    %221 = vmatpush.msra.mxu0 0.0
    %222 = vmatpush.msra.mxu0 0.0
    %223 = vmatpush.msra.mxu0 0.0
    %224 = vmatpush.msra.mxu0 %v155
    %225 = vmatmul.f32.gmra.mxu0 %v158
    %v226 = vpop.f32.mrf.mxu0
    %v227 = vadd.f32 0.0, %v226
    %228 = vmatmul.f32.gmra.mxu0 %v161
    %v229 = vpop.f32.mrf.mxu0
    %v230 = vadd.f32 0.0, %v229
    %231 = vdwg.mxu0
    %v232 = vmul.f32 %v181, %v133
    %v233 = vmul.f32 %v184, %v135
    %v234 = vadd.f32 %v232, %v204
    %v235 = vadd.f32 %v233, %v207
    %236 = vst [vmem:[#allocation7] sm:$0xff] %v234
    %237 = vst [vmem:[#allocation7 + $0x8] sm:$0xff] %v235
    %238 = vst [vmem:[#allocation8] sm:$0xff] %v227
    %239 = vst [vmem:[#allocation8 + $0x8] sm:$0xff] %v230
    // Predicated region
    $region26: #{tpu_custom_call.1} parent=1 // pred_check
      _
    $region27: #{tpu_custom_call.1} parent=1 // pred_check_branch
      %241 = sbr.rel (0) target = $region29
    $region28: #{tpu_custom_call.1} parent=1 // pred_region
      %243 = vsyncadd [#allocation4], 0
      %s244 = sshll.u32 [#allocation7], 4
      %s245 = int_to_ptr.vmem [resolvable:$true] %s244
      %s246 = sshll.u32 %s4, 4
      %s247 = int_to_ptr.hbm [resolvable:$true] %s246
      %252 = dma.vmem_to_hbm [thread:$0]  %s245, 256, %s247, [#allocation4], 128, 128, 8
    $region29: #{tpu_custom_call.1} parent=1 // pred_fallthru
      _
    // Predicated region
    $region30: #{tpu_custom_call.1} parent=1 // pred_check
      _
    $region31: #{tpu_custom_call.1} parent=1 // pred_check_branch
      %254 = sbr.rel (0) target = $region33
    $region32: #{tpu_custom_call.1} parent=1 // pred_region
      %256 = vsyncadd [#allocation9], 0
      %s257 = sshll.u32 [#allocation8], 4
      %s258 = int_to_ptr.vmem [resolvable:$true] %s257
      %s259 = sshll.u32 %s5, 4
      %s260 = int_to_ptr.hbm [resolvable:$true] %s259
      %265 = dma.vmem_to_hbm [thread:$0]  %s258, 256, %s260, [#allocation9], 128, 128, 8
    $region33: #{tpu_custom_call.1} parent=1 // pred_fallthru
      _
    // Predicated region
    $region34: #{tpu_custom_call.1} parent=1 // pred_check
      _
    $region35: #{tpu_custom_call.1} parent=1 // pred_check_branch
      %267 = sbr.rel (0) target = $region37
    $region36: #{tpu_custom_call.1} parent=1 // pred_region
      %269 = dma.done [#allocation4], 256
    $region37: #{tpu_custom_call.1} parent=1 // pred_fallthru
      _
    // Predicated region
    $region38: #{tpu_custom_call.1} parent=1 // pred_check
      _
    $region39: #{tpu_custom_call.1} parent=1 // pred_check_branch
      %271 = sbr.rel (0) target = $region41
    $region40: #{tpu_custom_call.1} parent=1 // pred_region
      %273 = dma.done [#allocation9], 256
    $region41: #{tpu_custom_call.1} parent=1 // pred_fallthru
      _
    %274 = vsyncpa [#allocation3], 1
    %275 = vsyncpa [#allocation6], 1
    %276 = vsyncpa [#allocation4], 1
    %277 = vsyncpa [#allocation9], 1

</llo_original>
